<compile_context>
chip_gen: v7x
topology: tpu7x:2x2x1
jax: 0.10.0
libtpu: 0.0.40
codegen_flags: <defaults>
</compile_context>

<pallas_src>
import functools

import jax
import jax.numpy as jnp
from jax import lax
from jax.experimental import pallas as pl
from jax.experimental.pallas import tpu as pltpu

_VMEM_LIMIT = 64 * 1024 * 1024  # explicit cap; safe on v7x's 64 MiB VMEM too


# --------------------------------------------------------------------------
# Tiled, pipelined linear:  y = x @ W^T + b
# --------------------------------------------------------------------------
def _linear_kernel(x_ref, w_ref, b_ref, o_ref, acc_ref):
    kk = pl.program_id(2)

    @pl.when(kk == 0)
    def _():
        acc_ref[...] = jnp.zeros_like(acc_ref)

    # x (tm, tk) · W (tn, tk) contracting axis 1 of both -> (tm, tn);
    # W is fed in its stored (out, in) layout, no transpose needed.
    acc_ref[...] += lax.dot_general(
        x_ref[...].astype(jnp.bfloat16),
        w_ref[...].astype(jnp.bfloat16),
        dimension_numbers=(((1,), (1,)), ((), ())),
        preferred_element_type=jnp.float32,
    )

    @pl.when(kk == pl.num_programs(2) - 1)
    def _():
        o_ref[...] = (acc_ref[...] + b_ref[...]).astype(o_ref.dtype)


def _pick_tile(dim, target):
    """Largest legal tile: `target` if it divides dim, else the full dim."""
    if dim <= target:
        return dim
    if dim % target == 0:
        return target
    # TODO(synk): pad ragged dims to (8,128)-aligned tiles for real shapes.
    return dim


def pallas_linear(x2d, weight, bias, out_dtype=jnp.float32,
                  tm_target=256, tn_target=256, tk_target=512):
    """x2d: (M, K)   weight: (Nout, K)   bias: (Nout,)  ->  (M, Nout)."""
    M, K = x2d.shape
    Nout = weight.shape[0]
    tm = _pick_tile(M, tm_target)
    tn = _pick_tile(Nout, tn_target)
    tk = _pick_tile(K, tk_target)
    b2 = bias.reshape(1, Nout).astype(jnp.float32)

    grid = (M // tm, Nout // tn, K // tk)
    return pl.pallas_call(
        _linear_kernel,
        out_shape=jax.ShapeDtypeStruct((M, Nout), out_dtype),
        grid_spec=pltpu.PrefetchScalarGridSpec(
            num_scalar_prefetch=0,
            grid=grid,
            in_specs=[
                pl.BlockSpec((tm, tk), lambda i, j, k: (i, k)),
                pl.BlockSpec((tn, tk), lambda i, j, k: (j, k)),
                pl.BlockSpec((1, tn), lambda i, j, k: (0, j)),
            ],
            out_specs=pl.BlockSpec((tm, tn), lambda i, j, k: (i, j)),
            scratch_shapes=[pltpu.VMEM((tm, tn), jnp.float32)],
        ),
        compiler_params=pltpu.CompilerParams(
            dimension_semantics=("parallel", "parallel", "arbitrary"),
            vmem_limit_bytes=_VMEM_LIMIT,
        ),
    )(x2d, weight, b2)


# --------------------------------------------------------------------------
# Batched-head scaled dot-product attention
# --------------------------------------------------------------------------
def _attention_kernel(q_ref, k_ref, v_ref, o_ref, w_ref, *, scaling):
    q = q_ref[...]                       # (G, L, hd) bf16
    k = k_ref[...]                       # (G, S, hd) bf16
    v = v_ref[...]                       # (G, S, hd) bf16

    # QK^T contracting hd directly (no k.T materialized), f32 accumulation.
    s = lax.dot_general(
        q, k,
        dimension_numbers=(((2,), (2,)), ((0,), (0,))),
        preferred_element_type=jnp.float32,
    ) * scaling                                                   # (G, L, S)

    s = s - jnp.max(s, axis=-1, keepdims=True)                    # f32 softmax
    p = jnp.exp(s)
    denom = jnp.sum(p, axis=-1, keepdims=True)
    w = p * pl.reciprocal(denom, approx=True)                     # EUP recip
    w_ref[...] = w.astype(w_ref.dtype)

    o = lax.dot_general(
        w.astype(v.dtype), v,
        dimension_numbers=(((2,), (1,)), ((0,), (0,))),
        preferred_element_type=jnp.float32,
    )                                                             # (G, L, hd)
    o_ref[...] = o.astype(o_ref.dtype)


def _pick_head_group(BH, L, S, hd, budget_bytes=4 * 1024 * 1024):
    # rough per-head VMEM: double-buffered bf16 q/k/v/o + f32 logits/weights
    per_head = 2 * ((L + 2 * S) * hd * 2 + L * S * 4) + (L * hd * 2 + L * S * 4)
    g = max(1, min(BH, budget_bytes // max(per_head, 1)))
    while BH % g:
        g -= 1
    return g


def pallas_attention(q, k, v, scaling):
    """q: (BH, L, hd)  k,v: (BH, S, hd)  ->  (out (BH,L,hd) bf16, weights (BH,L,S) f32)."""
    BH, L, hd = q.shape
    S = k.shape[1]
    G = _pick_head_group(BH, L, S, hd)
    kern = functools.partial(_attention_kernel, scaling=scaling)
    return pl.pallas_call(
        kern,
        grid=(BH // G,),
        out_shape=(
            jax.ShapeDtypeStruct((BH, L, hd), jnp.bfloat16),
            jax.ShapeDtypeStruct((BH, L, S), jnp.float32),
        ),
        in_specs=[
            pl.BlockSpec((G, L, hd), lambda i: (i, 0, 0)),
            pl.BlockSpec((G, S, hd), lambda i: (i, 0, 0)),
            pl.BlockSpec((G, S, hd), lambda i: (i, 0, 0)),
        ],
        out_specs=(
            pl.BlockSpec((G, L, hd), lambda i: (i, 0, 0)),
            pl.BlockSpec((G, L, S), lambda i: (i, 0, 0)),
        ),
        compiler_params=pltpu.CompilerParams(
            dimension_semantics=("parallel",),
            vmem_limit_bytes=_VMEM_LIMIT,
        ),
    )(q, k, v)


# --------------------------------------------------------------------------
# MultiheadAttention forward
# --------------------------------------------------------------------------
def multihead_attention_forward(params, query, key, value,
                                embed_dim, num_heads, scale_factor=1.0):
    """query: (L, N, E), key/value: (S, N, E).
    Returns (attn_output (L, N, E) f32, attn_output_weights (N, H, L, S) f32)."""
    L, N, E = query.shape
    S = key.shape[0]
    H = num_heads
    hd = E // H
    scaling = float(hd * scale_factor) ** (-0.5)

    w_in = params["in_proj_w"].astype(jnp.bfloat16)     # (3E, E)
    b_in = params["in_proj_b"]                          # (3E,)
    w_out = params["out_proj_w"].astype(jnp.bfloat16)   # (E, E)
    b_out = params["out_proj_b"]                        # (E,)

    bf = jnp.bfloat16

    # ---- in-projection (fused whenever inputs alias, like the PyTorch path) ----
    if query is key and key is value:
        # self-attention: single (T, 3E) matmul — one pass over x, one launch
        qkv = pallas_linear(query.astype(bf).reshape(L * N, E), w_in, b_in, bf)
        q = qkv[:, :E].reshape(L, N, E)
        k = qkv[:, E:2 * E].reshape(S, N, E)
        v = qkv[:, 2 * E:].reshape(S, N, E)
    elif key is value:
        q = pallas_linear(query.astype(bf).reshape(L * N, E),
                          w_in[:E], b_in[:E], bf).reshape(L, N, E)
        kv = pallas_linear(key.astype(bf).reshape(S * N, E),
                           w_in[E:], b_in[E:], bf)
        k = kv[:, :E].reshape(S, N, E)
        v = kv[:, E:].reshape(S, N, E)
    else:
        q = pallas_linear(query.astype(bf).reshape(L * N, E),
                          w_in[:E], b_in[:E], bf).reshape(L, N, E)
        k = pallas_linear(key.astype(bf).reshape(S * N, E),
                          w_in[E:2 * E], b_in[E:2 * E], bf).reshape(S, N, E)
        v = pallas_linear(value.astype(bf).reshape(S * N, E),
                          w_in[2 * E:], b_in[2 * E:], bf).reshape(S, N, E)

    # ---- split heads: (L, N, E) -> (N*H, L, hd) ----
    # TODO(synk): fold these transposes into BlockSpec index_maps.
    qh = jnp.transpose(q.reshape(L, N * H, hd), (1, 0, 2))
    kh = jnp.transpose(k.reshape(S, N * H, hd), (1, 0, 2))
    vh = jnp.transpose(v.reshape(S, N * H, hd), (1, 0, 2))

    attn_out_h, attn_w = pallas_attention(qh, kh, vh, scaling)

    # ---- merge heads and out-projection ----
    attn_out = jnp.transpose(attn_out_h, (1, 0, 2)).reshape(L, N, E)
    attn_out = pallas_linear(attn_out.reshape(L * N, E), w_out, b_out,
                             jnp.float32).reshape(L, N, E)

    attn_weights = attn_w.reshape(N, H, L, S)
    return attn_out, attn_weights


# --------------------------------------------------------------------------
# Pure-JAX f32 reference (mirrors the PyTorch forward) for verification
# --------------------------------------------------------------------------
def reference_forward(params, query, key, value, embed_dim, num_heads,
                      scale_factor=1.0):
    L, N, E = query.shape
    S = key.shape[0]
    hd = E // num_heads
    scaling = float(hd * scale_factor) ** (-0.5)
    w_in, b_in = params["in_proj_w"], params["in_proj_b"]
    w_out, b_out = params["out_proj_w"], params["out_proj_b"]
    w_q, w_k, w_v = w_in[:E], w_in[E:2 * E], w_in[2 * E:]
    b_q, b_k, b_v = b_in[:E], b_in[E:2 * E], b_in[2 * E:]
    q = query @ w_q.T + b_q
    k = key @ w_k.T + b_k
    v = value @ w_v.T + b_v
    qh = jnp.transpose(q.reshape(L, N * num_heads, hd), (1, 0, 2)) * scaling
    kh = jnp.transpose(k.reshape(S, N * num_heads, hd), (1, 0, 2))
    vh = jnp.transpose(v.reshape(S, N * num_heads, hd), (1, 0, 2))
    attn = jnp.einsum("bld,bsd->bls", qh, kh)
    attn = jax.nn.softmax(attn, axis=-1)
    out = jnp.einsum("bls,bsd->bld", attn, vh)
    out = jnp.transpose(out, (1, 0, 2)).reshape(L, N, E)
    out = out @ w_out.T + b_out
    return out, attn.reshape(N, num_heads, L, S)


def init_params(key, embed_dim):
    k1, k2 = jax.random.split(key)
    fan_in, fan_out = embed_dim, 3 * embed_dim
    bound = (6.0 / (fan_in + fan_out)) ** 0.5
    in_proj_w = jax.random.uniform(k1, (3 * embed_dim, embed_dim),
                                   jnp.float32, -bound, bound)
    in_proj_b = jnp.zeros((3 * embed_dim,), jnp.float32)
    b2 = (1.0 / embed_dim) ** 0.5
    out_proj_w = jax.random.uniform(k2, (embed_dim, embed_dim),
                                    jnp.float32, -b2, b2)
    out_proj_b = jnp.zeros((embed_dim,), jnp.float32)
    return {"in_proj_w": in_proj_w, "in_proj_b": in_proj_b,
            "out_proj_w": out_proj_w, "out_proj_b": out_proj_b}


if __name__ == "__main__":
    embed_dim, num_heads = 32, 4
    L, S, N = 8, 16, 2

    root = jax.random.PRNGKey(0)
    kp, kq, kk, kv = jax.random.split(root, 4)
    params = init_params(kp, embed_dim)

    # Tolerances reflect bf16 MXU operands with f32 accumulation.
    ATOL_OUT, RTOL_OUT = 5e-2, 5e-2
    ATOL_W, RTOL_W = 3e-2, 3e-2

    # --- self-attention (query is key is value): exercises fused QKV path ---
    x = jax.random.normal(kq, (L, N, embed_dim), jnp.float32)
    out_s, w_s = multihead_attention_forward(params, x, x, x,
                                             embed_dim, num_heads)
    out_s = jax.block_until_ready(out_s)
    w_s = jax.block_until_ready(w_s)
    ref_out_s, ref_w_s = reference_forward(params, x, x, x,
                                           embed_dim, num_heads)
    assert out_s.shape == (L, N, embed_dim)
    assert w_s.shape == (N, num_heads, L, L)
    assert jnp.allclose(out_s, ref_out_s, atol=ATOL_OUT, rtol=RTOL_OUT)
    assert jnp.allclose(w_s, ref_w_s, atol=ATOL_W, rtol=RTOL_W)

    # --- cross-attention (distinct q/k/v, L != S): exercises split path ---
    query = jax.random.normal(kq, (L, N, embed_dim), jnp.float32)
    key_t = jax.random.normal(kk, (S, N, embed_dim), jnp.float32)
    value = jax.random.normal(kv, (S, N, embed_dim), jnp.float32)
    out_c, w_c = multihead_attention_forward(params, query, key_t, value,
                                             embed_dim, num_heads)
    out_c = jax.block_until_ready(out_c)
    w_c = jax.block_until_ready(w_c)
    ref_out_c, ref_w_c = reference_forward(params, query, key_t, value,
                                           embed_dim, num_heads)
    assert out_c.shape == (L, N, embed_dim)
    assert w_c.shape == (N, num_heads, L, S)
    assert jnp.allclose(out_c, ref_out_c, atol=ATOL_OUT, rtol=RTOL_OUT)
    assert jnp.allclose(w_c, ref_w_c, atol=ATOL_W, rtol=RTOL_W)

    print("KERNEL_OK")
</pallas_src>

<mosaic_0001>
module attributes {stable_mosaic.version = 11 : i64} {
  func.func @_linear_kernel(%arg0: i32, %arg1: i32, %arg2: i32, %arg3: memref<16x32xbf16, #tpu.memory_space<vmem>>, %arg4: memref<96x32xbf16, #tpu.memory_space<vmem>>, %arg5: memref<1x96xf32, #tpu.memory_space<vmem>>, %arg6: memref<16x96xbf16, #tpu.memory_space<vmem>>, %arg7: memref<16x96xf32, #tpu.memory_space<vmem>>) attributes {dimension_semantics = [#tpu.dimension_semantics<parallel>, #tpu.dimension_semantics<parallel>, #tpu.dimension_semantics<arbitrary>], iteration_bounds = array<i64: 1, 1, 1>, scalar_prefetch = 0 : i64, scratch_operands = 1 : i64, tpu.core_type = #tpu.core_type<tc>, window_params = [{transform_indices = @transform_0, window_bounds = array<i64: 16, 32>}, {transform_indices = @transform_1, window_bounds = array<i64: 96, 32>}, {transform_indices = @transform_2, window_bounds = array<i64: 1, 96>}, {transform_indices = @transform_3, window_bounds = array<i64: 16, 96>}]} {
    %c0_i32 = arith.constant 0 : i32
    %0 = arith.cmpi eq, %arg2, %c0_i32 : i32
    %1 = arith.extui %0 : i1 to i32
    %c0_i32_0 = arith.constant 0 : i32
    %2 = arith.cmpi ne, %1, %c0_i32_0 : i32
    scf.if %2 {
      %cst_10 = arith.constant 0.000000e+00 : f32
      %12 = vector.broadcast %cst_10 : f32 to vector<16x96xf32>
      %c0_11 = arith.constant 0 : index
      %c0_12 = arith.constant 0 : index
      %13 = vector.load %arg7[%c0_11, %c0_12] : memref<16x96xf32, #tpu.memory_space<vmem>>, vector<16x96xf32>
      tpu.vector_store %arg7[%c0_11, %c0_12], %12 {strides = array<i32>} : memref<16x96xf32, #tpu.memory_space<vmem>>, vector<16x96xf32>,
    } else {
    }
    %c0 = arith.constant 0 : index
    %c0_1 = arith.constant 0 : index
    %3 = vector.load %arg7[%c0, %c0_1] : memref<16x96xf32, #tpu.memory_space<vmem>>, vector<16x96xf32>
    %c0_2 = arith.constant 0 : index
    %c0_3 = arith.constant 0 : index
    %4 = vector.load %arg3[%c0_2, %c0_3] : memref<16x32xbf16, #tpu.memory_space<vmem>>, vector<16x32xbf16>
    %c0_4 = arith.constant 0 : index
    %c0_5 = arith.constant 0 : index
    %5 = vector.load %arg4[%c0_4, %c0_5] : memref<96x32xbf16, #tpu.memory_space<vmem>>, vector<96x32xbf16>
    %cst = arith.constant dense<0.000000e+00> : vector<16x96xf32>
    %6 = tpu.matmul %4, %5, %cst {dimension_numbers = #tpu.dot_dimension_numbers<[1], [1], [0], [0], [0, 0, 1, 0], [], []>} : vector<16x32xbf16>, vector<96x32xbf16>, vector<16x96xf32> -> vector<16x96xf32>
    %7 = arith.addf %3, %6 : vector<16x96xf32>
    %c0_6 = arith.constant 0 : index
    %c0_7 = arith.constant 0 : index
    %8 = vector.load %arg7[%c0_6, %c0_7] : memref<16x96xf32, #tpu.memory_space<vmem>>, vector<16x96xf32>
    tpu.vector_store %arg7[%c0_6, %c0_7], %7 {strides = array<i32>} : memref<16x96xf32, #tpu.memory_space<vmem>>, vector<16x96xf32>,
    %c0_i32_8 = arith.constant 0 : i32
    %9 = arith.cmpi eq, %arg2, %c0_i32_8 : i32
    %10 = arith.extui %9 : i1 to i32
    %c0_i32_9 = arith.constant 0 : i32
    %11 = arith.cmpi ne, %10, %c0_i32_9 : i32
    scf.if %11 {
      %c0_10 = arith.constant 0 : index
      %c0_11 = arith.constant 0 : index
      %12 = vector.load %arg7[%c0_10, %c0_11] : memref<16x96xf32, #tpu.memory_space<vmem>>, vector<16x96xf32>
      %c0_12 = arith.constant 0 : index
      %c0_13 = arith.constant 0 : index
      %13 = vector.load %arg5[%c0_12, %c0_13] : memref<1x96xf32, #tpu.memory_space<vmem>>, vector<1x96xf32>
      %14 = vector.broadcast %13 : vector<1x96xf32> to vector<16x96xf32>
      %15 = arith.addf %12, %14 : vector<16x96xf32>
      %16 = arith.truncf %15 : vector<16x96xf32> to vector<16x96xbf16>
      %c0_14 = arith.constant 0 : index
      %c0_15 = arith.constant 0 : index
      %17 = vector.load %arg6[%c0_14, %c0_15] : memref<16x96xbf16, #tpu.memory_space<vmem>>, vector<16x96xbf16>
      tpu.vector_store %arg6[%c0_14, %c0_15], %16 {strides = array<i32>} : memref<16x96xbf16, #tpu.memory_space<vmem>>, vector<16x96xbf16>,
    } else {
    }
    return
  }
  func.func @transform_0(%arg0: i32, %arg1: i32, %arg2: i32) -> (i32, i32) {
    %c0_i32 = arith.constant 0 : i32
    return %arg0, %arg2 : i32, i32
  }
  func.func @transform_1(%arg0: i32, %arg1: i32, %arg2: i32) -> (i32, i32) {
    %c0_i32 = arith.constant 0 : i32
    return %arg1, %arg2 : i32, i32
  }
  func.func @transform_2(%arg0: i32, %arg1: i32, %arg2: i32) -> (i32, i32) {
    %c0_i32 = arith.constant 0 : i32
    %c0_i32_0 = arith.constant 0 : i32
    return %c0_i32, %arg1 : i32, i32
  }
  func.func @transform_3(%arg0: i32, %arg1: i32, %arg2: i32) -> (i32, i32) {
    %c0_i32 = arith.constant 0 : i32
    return %arg0, %arg1 : i32, i32
  }
}

</mosaic_0001>

<llo_original>
// kernel: tpu_custom_call.1
$region0: #{tpu_custom_call.1}
  #allocation0 [shape = 'u32[]', space=smem, size = 0x4, offset = 0x4, fixed_abs, tag = 'smem constant byte address 0x4 - core index']
  #allocation1 [shape = 'u32[144,128]{1,0:T(1,128)}', space=vmem, size = 0x12000, scoped, tag = 'internal scratch']
  #allocation2 [shape = 'f32[16,96]{1,0:T(8,128)}', space=vmem, size = 0x2000, scoped, tag = 'scratch operand']
  %s0 = inlined_call_operand.hbm [shape: bf16[16,32], index: 0, kind: input, shape index: {}]
  %s1 = inlined_call_operand.hbm [shape: bf16[96,32], index: 1, kind: input, shape index: {}]
  %s2 = inlined_call_operand.hbm [shape: f32[1,96], index: 2, kind: input, shape index: {}]
  %s3 = inlined_call_operand.hbm [shape: bf16[16,96], index: 3, kind: output, shape index: {}]
  %s4 = sld [smem:[#allocation0]]
  $region42: #{tpu_custom_call.1} parent=0
    _
  %s6 = ssub.s32 1, %s4
  %s7 = scalar_select 0, %s6, %s4
  $region1: #{tpu_custom_call.1} parent=0
    #allocation3 [shape = 'u8[4096]{0}', space=vmem, size = 0x1000, scoped, tag = 'input window, operand 0, single buffered']
    #allocation4 [shape = 's32[1]{0}', space=sflag, size = 0x4, scoped, tag = 'scoped memory for tpu_custom_call.1']
    #allocation5 [shape = 's32[1]{0}', space=sflag, size = 0x4, scoped, tag = 'scoped memory for tpu_custom_call.1']
    #allocation6 [shape = 'u8[24576]{0}', space=vmem, size = 0x6000, scoped, tag = 'input window, operand 1, single buffered']
    #allocation7 [shape = 's32[1]{0}', space=sflag, size = 0x4, scoped, tag = 'scoped memory for tpu_custom_call.1']
    #allocation8 [shape = 'u8[512]{0}', space=vmem, size = 0x400, scoped, tag = 'input window, operand 2, single buffered']
    #allocation9 [shape = 'u8[4096]{0}', space=vmem, size = 0x1000, scoped, tag = 'output window, operand 0, single buffered']
    %8 = vsyncpa [#allocation4], 0
    %9 = vsyncpa [#allocation7], 0
    %10 = vsyncpa [#allocation5], 0
    // Predicated region
    $region2: #{tpu_custom_call.1} parent=1 // pred_check
      _
    $region3: #{tpu_custom_call.1} parent=1 // pred_check_branch
      %12 = sbr.rel (0) target = $region5
    $region4: #{tpu_custom_call.1} parent=1 // pred_region
      %s14 = ssub.s32 128, 128
      %15 = vsyncadd [#allocation4], %s14
      %s16 = sshll.u32 [#allocation3], 4
      %s17 = int_to_ptr.vmem [resolvable:$true] %s16
      %22 = dma.hbm_to_vmem [thread:$0]  %s0, 128, %s17, [#allocation4], 64, 64, 4
    $region5: #{tpu_custom_call.1} parent=1 // pred_fallthru
      _
    // Predicated region
    $region6: #{tpu_custom_call.1} parent=1 // pred_check
      _
    $region7: #{tpu_custom_call.1} parent=1 // pred_check_branch
      %24 = sbr.rel (0) target = $region9
    $region8: #{tpu_custom_call.1} parent=1 // pred_region
      %s26 = ssub.s32 768, 768
      %27 = vsyncadd [#allocation7], %s26
      %s28 = sshll.u32 [#allocation6], 4
      %s29 = int_to_ptr.vmem [resolvable:$true] %s28
      %34 = dma.hbm_to_vmem [thread:$0]  %s1, 768, %s29, [#allocation7], 64, 64, 4
    $region9: #{tpu_custom_call.1} parent=1 // pred_fallthru
      _
    // Predicated region
    $region10: #{tpu_custom_call.1} parent=1 // pred_check
      _
    $region11: #{tpu_custom_call.1} parent=1 // pred_check_branch
      %36 = sbr.rel (0) target = $region13
    $region12: #{tpu_custom_call.1} parent=1 // pred_region
      %s38 = ssub.s32 16, 16
      %39 = vsyncadd [#allocation7], %s38
      %s41 = sshll.u32 [#allocation8], 4
      %s42 = int_to_ptr.vmem [resolvable:$true] %s41
      %44 = dma.hbm_to_vmem [thread:$0]  %s2, 16, %s42, [#allocation7]
    $region13: #{tpu_custom_call.1} parent=1 // pred_fallthru
      _
    // Predicated region
    $region14: #{tpu_custom_call.1} parent=1 // pred_check
      _
    $region15: #{tpu_custom_call.1} parent=1 // pred_check_branch
      %46 = sbr.rel (0) target = $region17
    $region16: #{tpu_custom_call.1} parent=1 // pred_region
      %47 = dma.done [#allocation4], 128
    $region17: #{tpu_custom_call.1} parent=1 // pred_fallthru
      _
    // Predicated region
    $region18: #{tpu_custom_call.1} parent=1 // pred_check
      _
    $region19: #{tpu_custom_call.1} parent=1 // pred_check_branch
      %49 = sbr.rel (0) target = $region21
    $region20: #{tpu_custom_call.1} parent=1 // pred_region
      %50 = dma.done [#allocation7], 768
    $region21: #{tpu_custom_call.1} parent=1 // pred_fallthru
      _
    // Predicated region
    $region22: #{tpu_custom_call.1} parent=1 // pred_check
      _
    $region23: #{tpu_custom_call.1} parent=1 // pred_check_branch
      %52 = sbr.rel (0) target = $region25
    $region24: #{tpu_custom_call.1} parent=1 // pred_region
      %53 = dma.done [#allocation7], 16
    $region25: #{tpu_custom_call.1} parent=1 // pred_fallthru
      _
    %p55 = scmp.eq.s32.totalorder 0, 0
    // Predicated region
    $region26: #{tpu_custom_call.1} parent=1 // pred_check
      %p56 = pneg %p55
    $region27: #{tpu_custom_call.1} parent=1 // pred_check_branch
      %58 = sbr.rel (%p56) target = $region29
    $region28: #{tpu_custom_call.1} parent=1 // pred_region
      %vm59 = vcmask 785408
      %60 = vst.msk [vmem:[#allocation2] sm:$0xff] %vm59, 0.0
      %61 = vst.msk [vmem:[#allocation2 + $0x8] sm:$0xff] %vm59, 0.0
    $region29: #{tpu_custom_call.1} parent=1 // pred_fallthru
      _
    %v62 = vld [vmem:[#allocation2] sm:$0xff]
    %v63 = vld [vmem:[#allocation2 + $0x8] sm:$0xff]
    %v64 = vld [vmem:[#allocation3] sm:$0xf]
    %v65 = vld [vmem:[#allocation3 + $0x4] sm:$0xf]
    %v66 = vld [vmem:[#allocation6] sm:$0xf]
    %v67 = vld [vmem:[#allocation6 + $0x4] sm:$0xf]
    %v68 = vld [vmem:[#allocation6 + $0x8] sm:$0xf]
    %v69 = vld [vmem:[#allocation6 + $0xc] sm:$0xf]
    %v70 = vld [vmem:[#allocation6 + $0x10] sm:$0xf]
    %v71 = vld [vmem:[#allocation6 + $0x14] sm:$0xf]
    %v72 = vld [vmem:[#allocation6 + $0x18] sm:$0xf]
    %v73 = vld [vmem:[#allocation6 + $0x1c] sm:$0xf]
    %v74 = vld [vmem:[#allocation6 + $0x20] sm:$0xf]
    %v75 = vld [vmem:[#allocation6 + $0x24] sm:$0xf]
    %v76 = vld [vmem:[#allocation6 + $0x28] sm:$0xf]
    %v77 = vld [vmem:[#allocation6 + $0x2c] sm:$0xf]
    %v80 = vunpack.c.l.b16 %v64
    %v81 = vunpack.c.l.b16 %v65
    %v82 = vpack.c.b16 %v81, %v80
    %v95 = vunpack.c.l.b16 %v66
    %v96 = vunpack.c.l.b16 %v67
    %v97 = vunpack.c.l.b16 %v68
    %v98 = vunpack.c.l.b16 %v69
    %v99 = vunpack.c.l.b16 %v70
    %v100 = vunpack.c.l.b16 %v71
    %v101 = vunpack.c.l.b16 %v72
    %v102 = vunpack.c.l.b16 %v73
    %v103 = vunpack.c.l.b16 %v74
    %v104 = vunpack.c.l.b16 %v75
    %v105 = vunpack.c.l.b16 %v76
    %v106 = vunpack.c.l.b16 %v77
    %v107 = vpack.c.b16 %v96, %v95
    %v108 = vpack.c.b16 %v98, %v97
    %v109 = vpack.c.b16 %v100, %v99
    %v110 = vpack.c.b16 %v102, %v101
    %v111 = vpack.c.b16 %v104, %v103
    %v112 = vpack.c.b16 %v106, %v105
    %vm113 = vcmask 261120
    %v115 = vsel %vm113, %v82, 0
    %v118 = vsel %vm113, %v107, 0
    %v121 = vsel %vm113, %v108, 0
    %v124 = vsel %vm113, %v109, 0
    %v127 = vsel %vm113, %v110, 0
    %v130 = vsel %vm113, %v111, 0
    %v133 = vsel %vm113, %v112, 0
    %135 = vmatprep.subr.bf16.mxu0 0
    %136 = vmatpush1.bf16.xpose.msra.mxu0 %v118
    %137 = vmatprep.subr.bf16.mxu0 0
    %138 = vmatpush1.bf16.xpose.msra.mxu0 %v121
    %139 = vmatprep.subr.bf16.mxu0 0
    %140 = vmatpush1.bf16.xpose.msra.mxu0 %v124
    %141 = vmatprep.subr.bf16.mxu0 0
    %142 = vmatpush1.bf16.xpose.msra.mxu0 %v127
    %143 = vmatprep.subr.bf16.mxu0 0
    %144 = vmatpush1.bf16.xpose.msra.mxu0 %v130
    %145 = vmatprep.subr.bf16.mxu0 0
    %146 = vmatpush1.bf16.xpose.msra.mxu0 %v133
    %147 = vmatprep.subr.bf16.mxu0 0
    %148 = vmatpush1.bf16.xpose.msra.mxu0 0
    %149 = vmatprep.subr.bf16.mxu0 0
    %150 = vmatpush1.bf16.xpose.msra.mxu0 0
    %151 = vmatprep.subr.bf16.mxu0 0
    %152 = vmatpush1.bf16.xpose.msra.mxu0 0
    %153 = vmatprep.subr.bf16.mxu0 0
    %154 = vmatpush1.bf16.xpose.msra.mxu0 0
    %155 = vmatprep.subr.bf16.mxu0 0
    %156 = vmatpush1.bf16.xpose.msra.mxu0 0
    %157 = vmatprep.subr.bf16.mxu0 0
    %158 = vmatpush1.bf16.xpose.msra.mxu0 0
    %159 = vmatprep.subr.bf16.mxu0 0
    %160 = vmatpush1.bf16.xpose.msra.mxu0 0
    %161 = vmatprep.subr.bf16.mxu0 0
    %162 = vmatpush1.bf16.xpose.msra.mxu0 0
    %163 = vmatprep.subr.bf16.mxu0 0
    %164 = vmatpush1.bf16.xpose.msra.mxu0 0
    %165 = vmatprep.subr.bf16.mxu0 0
    %166 = vmatpush1.bf16.xpose.msra.mxu0 0
    %167 = vmatprep.mubr.bf16.mxu0 0
    %168 = vmatmul.mubr.bf16.gmra.mrb[0].mxu0 %v115
    %v169 = vpop.f32.mrb[0].mxu0
    %v170 = vadd.f32 0.0, %v169
    %v171 = vpop.f32.mrb[0].mxu0
    %v172 = vpop.f32.mrb[0].mxu0
    %v173 = vadd.f32 0.0, %v172
    %v174 = vpop.f32.mrb[0].mxu0
    %175 = vdwg.mxu0
    %v176 = vadd.f32 %v62, %v170
    %v177 = vadd.f32 %v63, %v173
    %vm178 = vcmask 785408
    %179 = vst.msk [vmem:[#allocation2] sm:$0xff] %vm178, %v176
    %180 = vst.msk [vmem:[#allocation2 + $0x8] sm:$0xff] %vm178, %v177
    // Predicated region
    $region30: #{tpu_custom_call.1} parent=1 // pred_check
      %p181 = pneg %p55
    $region31: #{tpu_custom_call.1} parent=1 // pred_check_branch
      %183 = sbr.rel (%p181) target = $region33
    $region32: #{tpu_custom_call.1} parent=1 // pred_region
      %v184 = vld [vmem:[#allocation2] sm:$0xff]
      %v185 = vld [vmem:[#allocation2 + $0x8] sm:$0xff]
      %v186 = vld [vmem:[#allocation8] sm:$0x1]
      %v188 = vlaneseq
      %v189 = vshrl.u32 %v188, 7
      %v190 = vsub.s32 0, %v189
      %v191 = vrot.slane %v186, %v190
      %v193 = vadd.f32 %v184, %v191
      %v194 = vadd.f32 %v185, %v191
      %v195 = vpack.c.bf16 %v194, %v193
      %v197 = vunpack.c.l.b16 %v195
      %v198 = vunpack.c.h.b16 %v195
      %v199 = vpack.c.b16 %v197, %v197
      %v200 = vpack.c.b16 %v198, %v198
      %vm203 = vcmask 781312
      %204 = vst.msk [vmem:[#allocation9] sm:$0xf] %vm203, %v199
      %205 = vst.msk [vmem:[#allocation9 + $0x4] sm:$0xf] %vm203, %v200
    $region33: #{tpu_custom_call.1} parent=1 // pred_fallthru
      _
    // Predicated region
    $region34: #{tpu_custom_call.1} parent=1 // pred_check
      _
    $region35: #{tpu_custom_call.1} parent=1 // pred_check_branch
      %207 = sbr.rel (0) target = $region37
    $region36: #{tpu_custom_call.1} parent=1 // pred_region
      %s209 = ssub.s32 128, 128
      %210 = vsyncadd [#allocation5], %s209
      %s211 = sshll.u32 [#allocation9], 4
      %s212 = int_to_ptr.vmem [resolvable:$true] %s211
      %217 = dma.vmem_to_hbm [thread:$0]  %s212, 128, %s3, [#allocation5], 64, 64, 4
    $region37: #{tpu_custom_call.1} parent=1 // pred_fallthru
      _
    // Predicated region
    $region38: #{tpu_custom_call.1} parent=1 // pred_check
      _
    $region39: #{tpu_custom_call.1} parent=1 // pred_check_branch
      %219 = sbr.rel (0) target = $region41
    $region40: #{tpu_custom_call.1} parent=1 // pred_region
      %220 = dma.done [#allocation5], 128
    $region41: #{tpu_custom_call.1} parent=1 // pred_fallthru
      _
    %221 = vsyncpa [#allocation4], 1
    %222 = vsyncpa [#allocation7], 1
    %223 = vsyncpa [#allocation5], 1

</llo_original>
